<compile_context>
chip_gen: v7x
topology: tpu7x:2x2x1
jax: 0.10.0
libtpu: 0.0.40
codegen_flags: <defaults>
</compile_context>

<pallas_src>
import functools

import jax
import jax.numpy as jnp
import numpy as np
from jax.experimental import pallas as pl
from jax.experimental.pallas import tpu as pltpu


def _round_up(x, m):
    return (x + m - 1) // m * m


def _conv1d_kernel(x_ref, w_ref, b_ref, o_ref, xcat_ref, *, K, dilation, TT, C_in):
    # x_ref:    (1, T_in_pad, C_in)  padded input, resident for this batch elt
    # w_ref:    (K*C_in, C_out_pad)  folded taps, resident across the grid
    # b_ref:    (1, C_out_pad)       bias (zero-padded)
    # o_ref:    (1, TT, C_out_pad)   output tile
    # xcat_ref: (TT, K*C_in)         VMEM scratch: im2col window for this tile
    t = pl.program_id(1)
    base = pl.multiple_of(t * TT, 8)  # TT is a multiple of 16

    # Gather the K shifted windows into one [TT, K*C_in] operand so the whole
    # tap sum becomes a single wide MXU contraction. K is small & static.
    for k in range(K):
        xcat_ref[:, k * C_in:(k + 1) * C_in] = (
            x_ref[0, pl.ds(base + k * dilation, TT), :])

    acc = jnp.dot(xcat_ref[...], w_ref[...], preferred_element_type=jnp.float32)
    acc = acc + b_ref[...].astype(jnp.float32)   # broadcast (1, C_out_pad)
    o_ref[0] = acc.astype(o_ref.dtype)


def conv_norm_forward(x, weight, bias=None, *, stride=1, padding=None,
                      dilation=1, t_tile=512):
    """ConvNorm.forward: Conv1d(in_channels, out_channels, kernel_size, ...).

    x:      [B, C_in, T]        (PyTorch NCW layout)
    weight: [C_out, C_in, K]    (PyTorch Conv1d weight layout)
    bias:   [C_out] or None
    returns [B, C_out, T_out]
    """
    B, C_in, T = x.shape
    C_out, C_in_w, K = weight.shape
    assert C_in_w == C_in
    if padding is None:
        assert K % 2 == 1
        padding = (dilation * (K - 1)) // 2          # integer division
    if stride != 1:
        # TODO(synk): stride > 1 not implemented in the Pallas kernel.
        raise NotImplementedError(
            "ConvNorm Pallas kernel only implements stride=1 (got stride=%d)" % stride)

    halo = dilation * (K - 1)
    T_out = T + 2 * padding - halo
    assert T_out > 0

    # ---- tile / padding geometry ----
    TT = min(_round_up(t_tile, 16), _round_up(T_out, 16))   # time tile
    T_out_p = _round_up(T_out, TT)
    C_out_p = _round_up(C_out, 128)                         # lane-dense stores
    T_in_p = _round_up(T_out_p + halo, 16)                  # covers last halo

    # ---- wrapper-side layout glue (plain XLA) ----
    x_t = jnp.transpose(x, (0, 2, 1))                       # [B, T, C_in]
    x_pad = jnp.pad(x_t, ((0, 0), (padding, T_in_p - T - padding), (0, 0)))
    # weight [C_out, C_in, K] -> folded [K*C_in, C_out_p], row = k*C_in + c
    w_fold = jnp.transpose(weight, (2, 1, 0)).reshape(K * C_in, C_out)
    w_fold = jnp.pad(w_fold, ((0, 0), (0, C_out_p - C_out))).astype(x.dtype)
    if bias is None:
        bias = jnp.zeros((C_out,), x.dtype)
    b_pad = jnp.pad(bias, (0, C_out_p - C_out)).reshape(1, C_out_p)

    kernel = functools.partial(_conv1d_kernel, K=K, dilation=dilation,
                               TT=TT, C_in=C_in)
    n_t = T_out_p // TT

    out = pl.pallas_call(
        kernel,
        out_shape=jax.ShapeDtypeStruct((B, T_out_p, C_out_p), x.dtype),
        grid=(B, n_t),
        in_specs=[
            # Padded input: resident per batch element; constant block index
            # across the inner T-tile axis -> fetched once per batch element.
            # TODO(synk): halo-tiled input (pl.Element) for very long T.
            pl.BlockSpec((1, T_in_p, C_in), lambda b, t: (b, 0, 0)),
            # Folded weights + bias: constant across the whole grid -> resident.
            pl.BlockSpec((K * C_in, C_out_p), lambda b, t: (0, 0)),
            pl.BlockSpec((1, C_out_p), lambda b, t: (0, 0)),
        ],
        out_specs=pl.BlockSpec((1, TT, C_out_p), lambda b, t: (b, t, 0)),
        scratch_shapes=[pltpu.VMEM((TT, K * C_in), x.dtype)],
        compiler_params=pltpu.CompilerParams(
            dimension_semantics=("parallel", "parallel"),   # megacore-friendly
            vmem_limit_bytes=48 * 1024 * 1024,              # headroom on v7x
        ),
    )(x_pad, w_fold, b_pad)

    out = out[:, :T_out, :C_out]
    # TODO(synk): emit time-major [B, T_out, C_out] directly if the consumer
    # accepts NTC, to skip this extra HBM transpose pass.
    return jnp.transpose(out, (0, 2, 1))                    # [B, C_out, T_out]


if __name__ == "__main__":
    def torch_conv1d_ref(x, w, b, padding, dilation):
        out = jax.lax.conv_general_dilated(
            x, w, window_strides=(1,), padding=[(padding, padding)],
            rhs_dilation=(dilation,), dimension_numbers=("NCH", "OIH", "NCH"))
        return out + b[None, :, None]

    # Config 1: ConvNorm(in=4, out=8, kernel_size=3), B=2, T=16 — f32 and bf16.
    B, C_in, C_out, T, K, dil = 2, 4, 8, 16, 3, 1
    kx, kw, kb = jax.random.split(jax.random.PRNGKey(0), 3)
    x = jax.random.normal(kx, (B, C_in, T), dtype=jnp.float32)
    fan_in, fan_out = C_in * K, C_out * K
    limit = float(np.sqrt(6.0 / (fan_in + fan_out)))   # Xavier-uniform, gain=1
    w = jax.random.uniform(kw, (C_out, C_in, K), dtype=jnp.float32,
                           minval=-limit, maxval=limit)
    b = jax.random.uniform(kb, (C_out,), dtype=jnp.float32,
                           minval=-0.1, maxval=0.1)

    pad = (dil * (K - 1)) // 2
    ref = torch_conv1d_ref(x, w, b, pad, dil)

    out = jax.block_until_ready(conv_norm_forward(x, w, b, dilation=dil))
    np.testing.assert_allclose(np.asarray(out), np.asarray(ref),
                               rtol=1e-5, atol=1e-5)

    # bf16 operands go straight to the MXU (no f32 up-cast inside the kernel).
    out_bf16 = jax.block_until_ready(conv_norm_forward(
        x.astype(jnp.bfloat16), w.astype(jnp.bfloat16), b.astype(jnp.bfloat16),
        dilation=dil))
    np.testing.assert_allclose(np.asarray(out_bf16).astype(np.float32),
                               np.asarray(ref), rtol=5e-2, atol=5e-2)

    # Config 2: kernel_size=5, dilation=2 (exercises default 'same' padding).
    B2, Ci2, Co2, T2, K2, dil2 = 1, 6, 10, 20, 5, 2
    kx2, kw2, kb2 = jax.random.split(jax.random.PRNGKey(1), 3)
    x2 = jax.random.normal(kx2, (B2, Ci2, T2), dtype=jnp.float32)
    w2 = jax.random.uniform(kw2, (Co2, Ci2, K2), dtype=jnp.float32,
                            minval=-0.3, maxval=0.3)
    b2 = jax.random.uniform(kb2, (Co2,), dtype=jnp.float32,
                            minval=-0.1, maxval=0.1)
    pad2 = (dil2 * (K2 - 1)) // 2
    ref2 = torch_conv1d_ref(x2, w2, b2, pad2, dil2)
    out2 = jax.block_until_ready(conv_norm_forward(x2, w2, b2, dilation=dil2))
    np.testing.assert_allclose(np.asarray(out2), np.asarray(ref2),
                               rtol=1e-5, atol=1e-5)

    print("KERNEL_OK")
</pallas_src>

<mosaic_0001>
module attributes {stable_mosaic.version = 11 : i64} {
  func.func @_conv1d_kernel(%arg0: i32, %arg1: i32, %arg2: memref<1x32x4xf32, #tpu.memory_space<vmem>>, %arg3: memref<12x128xf32, #tpu.memory_space<vmem>>, %arg4: memref<1x128xf32, #tpu.memory_space<vmem>>, %arg5: memref<1x16x128xf32, #tpu.memory_space<vmem>>, %arg6: memref<16x12xf32, #tpu.memory_space<vmem>>) attributes {dimension_semantics = [#tpu.dimension_semantics<parallel>, #tpu.dimension_semantics<parallel>], iteration_bounds = array<i64: 2, 1>, scalar_prefetch = 0 : i64, scratch_operands = 1 : i64, tpu.core_type = #tpu.core_type<tc>, window_params = [{transform_indices = @transform_0, window_bounds = array<i64: 1, 32, 4>}, {pipeline_mode = #tpu.pipeline_mode<synchronous>, transform_indices = @transform_1, window_bounds = array<i64: 12, 128>}, {pipeline_mode = #tpu.pipeline_mode<synchronous>, transform_indices = @transform_2, window_bounds = array<i64: 1, 128>}, {transform_indices = @transform_3, window_bounds = array<i64: 1, 16, 128>}]} {
    %c16_i32 = arith.constant 16 : i32
    %0 = arith.muli %arg1, %c16_i32 : i32
    %1 = tpu.assume_multiple %0, 8 : i32
    %c0_i32 = arith.constant 0 : i32
    %2 = arith.addi %1, %c0_i32 : i32
    %c0 = arith.constant 0 : index
    %3 = arith.index_cast %2 : i32 to index
    %c0_0 = arith.constant 0 : index
    %4 = vector.load %arg2[%c0, %3, %c0_0] : memref<1x32x4xf32, #tpu.memory_space<vmem>>, vector<1x16x4xf32>
    %5 = vector.shape_cast %4 : vector<1x16x4xf32> to vector<16x4xf32>
    %c0_1 = arith.constant 0 : index
    %c0_2 = arith.constant 0 : index
    %6 = vector.load %arg6[%c0_1, %c0_2] : memref<16x12xf32, #tpu.memory_space<vmem>>, vector<16x4xf32>
    tpu.vector_store %arg6[%c0_1, %c0_2], %5 {strides = array<i32>} : memref<16x12xf32, #tpu.memory_space<vmem>>, vector<16x4xf32>,
    %c1_i32 = arith.constant 1 : i32
    %7 = arith.addi %1, %c1_i32 : i32
    %c0_3 = arith.constant 0 : index
    %8 = arith.index_cast %7 : i32 to index
    %c0_4 = arith.constant 0 : index
    %9 = vector.load %arg2[%c0_3, %8, %c0_4] : memref<1x32x4xf32, #tpu.memory_space<vmem>>, vector<1x16x4xf32>
    %10 = vector.shape_cast %9 : vector<1x16x4xf32> to vector<16x4xf32>
    %c0_5 = arith.constant 0 : index
    %c4 = arith.constant 4 : index
    %11 = vector.load %arg6[%c0_5, %c4] : memref<16x12xf32, #tpu.memory_space<vmem>>, vector<16x4xf32>
    tpu.vector_store %arg6[%c0_5, %c4], %10 {strides = array<i32>} : memref<16x12xf32, #tpu.memory_space<vmem>>, vector<16x4xf32>,
    %c2_i32 = arith.constant 2 : i32
    %12 = arith.addi %1, %c2_i32 : i32
    %c0_6 = arith.constant 0 : index
    %13 = arith.index_cast %12 : i32 to index
    %c0_7 = arith.constant 0 : index
    %14 = vector.load %arg2[%c0_6, %13, %c0_7] : memref<1x32x4xf32, #tpu.memory_space<vmem>>, vector<1x16x4xf32>
    %15 = vector.shape_cast %14 : vector<1x16x4xf32> to vector<16x4xf32>
    %c0_8 = arith.constant 0 : index
    %c8 = arith.constant 8 : index
    %16 = vector.load %arg6[%c0_8, %c8] : memref<16x12xf32, #tpu.memory_space<vmem>>, vector<16x4xf32>
    tpu.vector_store %arg6[%c0_8, %c8], %15 {strides = array<i32>} : memref<16x12xf32, #tpu.memory_space<vmem>>, vector<16x4xf32>,
    %c0_9 = arith.constant 0 : index
    %c0_10 = arith.constant 0 : index
    %17 = vector.load %arg6[%c0_9, %c0_10] : memref<16x12xf32, #tpu.memory_space<vmem>>, vector<16x12xf32>
    %c0_11 = arith.constant 0 : index
    %c0_12 = arith.constant 0 : index
    %18 = vector.load %arg3[%c0_11, %c0_12] : memref<12x128xf32, #tpu.memory_space<vmem>>, vector<12x128xf32>
    %cst = arith.constant dense<0.000000e+00> : vector<16x128xf32>
    %19 = tpu.matmul %17, %18, %cst {dimension_numbers = #tpu.dot_dimension_numbers<[1], [0], [0], [1], [0, 0, 1, 1], [], []>} : vector<16x12xf32>, vector<12x128xf32>, vector<16x128xf32> -> vector<16x128xf32>
    %c0_13 = arith.constant 0 : index
    %c0_14 = arith.constant 0 : index
    %20 = vector.load %arg4[%c0_13, %c0_14] : memref<1x128xf32, #tpu.memory_space<vmem>>, vector<1x128xf32>
    %21 = vector.broadcast %20 : vector<1x128xf32> to vector<16x128xf32>
    %22 = arith.addf %19, %21 : vector<16x128xf32>
    %c0_15 = arith.constant 0 : index
    %c0_16 = arith.constant 0 : index
    %c0_17 = arith.constant 0 : index
    %23 = vector.load %arg5[%c0_15, %c0_16, %c0_17] : memref<1x16x128xf32, #tpu.memory_space<vmem>>, vector<1x16x128xf32>
    %24 = vector.shape_cast %23 : vector<1x16x128xf32> to vector<16x128xf32>
    %25 = vector.shape_cast %22 : vector<16x128xf32> to vector<1x16x128xf32>
    tpu.vector_store %arg5[%c0_15, %c0_16, %c0_17], %25 {strides = array<i32>} : memref<1x16x128xf32, #tpu.memory_space<vmem>>, vector<1x16x128xf32>,
    return
  }
  func.func @transform_0(%arg0: i32, %arg1: i32) -> (i32, i32, i32) {
    %c0_i32 = arith.constant 0 : i32
    %c0_i32_0 = arith.constant 0 : i32
    %c0_i32_1 = arith.constant 0 : i32
    return %arg0, %c0_i32, %c0_i32_0 : i32, i32, i32
  }
  func.func @transform_1(%arg0: i32, %arg1: i32) -> (i32, i32) {
    %c0_i32 = arith.constant 0 : i32
    %c0_i32_0 = arith.constant 0 : i32
    %c0_i32_1 = arith.constant 0 : i32
    return %c0_i32, %c0_i32_0 : i32, i32
  }
  func.func @transform_2(%arg0: i32, %arg1: i32) -> (i32, i32) {
    %c0_i32 = arith.constant 0 : i32
    %c0_i32_0 = arith.constant 0 : i32
    %c0_i32_1 = arith.constant 0 : i32
    return %c0_i32, %c0_i32_0 : i32, i32
  }
  func.func @transform_3(%arg0: i32, %arg1: i32) -> (i32, i32, i32) {
    %c0_i32 = arith.constant 0 : i32
    %c0_i32_0 = arith.constant 0 : i32
    return %arg0, %arg1, %c0_i32 : i32, i32, i32
  }
}

</mosaic_0001>

<llo_original>
// kernel: tpu_custom_call.1
$region0: #{tpu_custom_call.1}
  #allocation0 [shape = 'u32[]', space=smem, size = 0x4, offset = 0x4, fixed_abs, tag = 'smem constant byte address 0x4 - core index']
  #allocation1 [shape = 'u32[144,128]{1,0:T(1,128)}', space=vmem, size = 0x12000, scoped, tag = 'internal scratch']
  #allocation2 [shape = 'f32[16,12]{1,0:T(8,128)}', space=vmem, size = 0x2000, scoped, tag = 'scratch operand']
  %s0 = inlined_call_operand.vmem [shape: f32[2,32,4], index: 0, kind: input, shape index: {}]
  %s1 = inlined_call_operand.vmem [shape: f32[12,128], index: 1, kind: input, shape index: {}]
  %s2 = inlined_call_operand.vmem [shape: f32[1,128], index: 2, kind: input, shape index: {}]
  %s3 = inlined_call_operand.hbm [shape: f32[2,16,128], index: 3, kind: output, shape index: {}]
  %s4 = sld [smem:[#allocation0]]
  $region45: #{tpu_custom_call.1} parent=0
    _
  %s6 = ssub.s32 1, %s4
  %s7 = scalar_select 0, %s6, %s4
  $region1: #{tpu_custom_call.1} parent=0
    #allocation3 [shape = 'u8[16384]{0}', space=vmem, size = 0x4000, scoped, tag = 'output window, operand 0']
    #allocation4 [shape = 's32[2]{0}', space=sflag, size = 0x8, scoped, tag = 'scoped memory for tpu_custom_call.1']
    %8 = vsyncpa [#allocation4], 0
    %s9 = scalar_lea.sflag [#allocation4], 1
    %10 = vsyncpa %s9, 0
    loop: start=0, step=1, limit=4
    $region2: #{tpu_custom_call.1} parent=1 // loop_pre_header
      _
    $region3: #{tpu_custom_call.1} parent=1 // loop_header
      %s12 = sphi 0, %s16
      %p13 = scmp.ge.s32.totalorder %s12, 4
      %s19 = sphi 0, %s31
      %s20 = sphi 0, %s27
      %s21 = sphi 0, %s19
      %s22 = sphi 0, %s20
      %s23 = sphi 0, %s21
      %s24 = sphi 0, %s22
      %s34 = sphi 0, %s36
      %s37 = sphi 0, %s34
      %s38 = sphi 0, %s37
      %s54 = sphi 0, %s38
      %s58 = sphi 0, %s58
      %s60 = sphi 0, %s58
      %s61 = sphi 0, %s60
      %s75 = sphi 0, %s61
      %s79 = sphi 0, %s79
      %s81 = sphi 0, %s79
      %s82 = sphi 0, %s81
      %s96 = sphi 0, %s82
      %s104 = sphi 0, %s106
      %s107 = sphi 0, %s104
      %s108 = sphi 0, %s107
      %s124 = sphi 0, %s108
    $region4: #{tpu_custom_call.1} parent=1 // loop_header_branch
      %15 = sbr.rel (%p13) target = $region8
    $region5: #{tpu_custom_call.1} parent=1 // loop_body
      %s17 = ssub.s32 %s12, 1
      %s18 = ssub.s32 %s12, 2
      %s25 = sadd.s32 1, %s20
      %p26 = scmp.ge.s32.totalorder %s25, 1
      %s27 = scalar_select %p26, 0, %s25
      %s28 = sadd.s32 1, %s19
      %s29 = scalar_select %p26, %s28, %s19
      %p30 = scmp.ge.s32.totalorder %s29, 2
      %s31 = scalar_select %p30, 0, %s29
      %s32 = ssub.s32 %s19, %s31
      %p33 = scmp.eq.s32.totalorder %s32, 0
      %s35 = sadd.s32 %s34, 1
      %s36 = scalar_select %p33, %s34, %s35
      %p39 = pneg %p33
      %p40 = scmp.eq.s32.totalorder %s12, 1
      %p41 = por %p39, %p40
      %p42 = scmp.ne.s32.totalorder %s34, %s37
      %p43 = scmp.eq.s32.totalorder %s12, 0
      %p44 = por %p42, %p43
      %p45 = scmp.ne.s32.totalorder %s34, %s37
      %p46 = scmp.eq.s32.totalorder %s17, 1
      %p47 = por %p45, %p46
      %p48 = scmp.ne.s32.totalorder %s37, %s38
      %p49 = scmp.eq.s32.totalorder %s17, 0
      %p50 = por %p48, %p49
      %p51 = scmp.ne.s32.totalorder %s37, %s38
      %p52 = scmp.eq.s32.totalorder %s18, 1
      %p53 = por %p51, %p52
      %p55 = scmp.ne.s32.totalorder %s38, %s54
      %p56 = scmp.eq.s32.totalorder %s18, 0
      %p57 = por %p55, %p56
      %s59 = sadd.s32 %s58, 1
      %p62 = scmp.eq.s32.totalorder %s12, 1
      %p63 = scmp.ne.s32.totalorder %s58, %s60
      %p64 = scmp.eq.s32.totalorder %s12, 0
      %p65 = por %p63, %p64
      %p66 = scmp.ne.s32.totalorder %s58, %s60
      %p67 = scmp.eq.s32.totalorder %s17, 1
      %p68 = por %p66, %p67
      %p69 = scmp.ne.s32.totalorder %s60, %s61
      %p70 = scmp.eq.s32.totalorder %s17, 0
      %p71 = por %p69, %p70
      %p72 = scmp.ne.s32.totalorder %s60, %s61
      %p73 = scmp.eq.s32.totalorder %s18, 1
      %p74 = por %p72, %p73
      %p76 = scmp.ne.s32.totalorder %s61, %s75
      %p77 = scmp.eq.s32.totalorder %s18, 0
      %p78 = por %p76, %p77
      %s80 = sadd.s32 %s79, 1
      %p83 = scmp.eq.s32.totalorder %s12, 1
      %p84 = scmp.ne.s32.totalorder %s79, %s81
      %p85 = scmp.eq.s32.totalorder %s12, 0
      %p86 = por %p84, %p85
      %p87 = scmp.ne.s32.totalorder %s79, %s81
      %p88 = scmp.eq.s32.totalorder %s17, 1
      %p89 = por %p87, %p88
      %p90 = scmp.ne.s32.totalorder %s81, %s82
      %p91 = scmp.eq.s32.totalorder %s17, 0
      %p92 = por %p90, %p91
      %p93 = scmp.ne.s32.totalorder %s81, %s82
      %p94 = scmp.eq.s32.totalorder %s18, 1
      %p95 = por %p93, %p94
      %p97 = scmp.ne.s32.totalorder %s82, %s96
      %p98 = scmp.eq.s32.totalorder %s18, 0
      %p99 = por %p97, %p98
      %s100 = ssub.s32 %s19, %s31
      %s101 = ssub.s32 %s20, %s27
      %s102 = sor.u32 %s100, %s101
      %p103 = scmp.eq.s32.totalorder %s102, 0
      %s105 = sadd.s32 %s104, 1
      %s106 = scalar_select %p103, %s104, %s105
      %p109 = pneg %p103
      %p110 = scmp.eq.s32.totalorder %s12, 1
      %p111 = por %p109, %p110
      %p112 = scmp.ne.s32.totalorder %s104, %s107
      %p113 = scmp.eq.s32.totalorder %s12, 0
      %p114 = por %p112, %p113
      %p115 = scmp.ne.s32.totalorder %s104, %s107
      %p116 = scmp.eq.s32.totalorder %s17, 1
      %p117 = por %p115, %p116
      %p118 = scmp.ne.s32.totalorder %s107, %s108
      %p119 = scmp.eq.s32.totalorder %s17, 0
      %p120 = por %p118, %p119
      %p121 = scmp.ne.s32.totalorder %s107, %s108
      %p122 = scmp.eq.s32.totalorder %s18, 1
      %p123 = por %p121, %p122
      %p125 = scmp.ne.s32.totalorder %s108, %s124
      %p126 = scmp.eq.s32.totalorder %s18, 0
      %p127 = por %p125, %p126
      %p128 = scmp.le.s32.totalorder 1, %s12
      %p129 = scmp.lt.s32.totalorder %s12, 3
      %p130 = pnand %p128, %p129
      %p131 = pneg %p130
      // Predicated region
      $region9: #{tpu_custom_call.1} parent=5 // pred_check
        _
      $region10: #{tpu_custom_call.1} parent=5 // pred_check_branch
        %133 = sbr.rel (%p130) target = $region12
      $region11: #{tpu_custom_call.1} parent=5 // pred_region
        %s134 = ssub.s32 %s12, 1
        // Predicated region
        $region13: #{tpu_custom_call.1} parent=11 // pred_check
          %p135 = pneg %p71
        $region14: #{tpu_custom_call.1} parent=11 // pred_check_branch
          %137 = sbr.rel (%p135) target = $region16
        $region15: #{tpu_custom_call.1} parent=11 // pred_region
          _
        $region16: #{tpu_custom_call.1} parent=11 // pred_fallthru
          _
        // Predicated region
        $region17: #{tpu_custom_call.1} parent=11 // pred_check
          %p138 = pneg %p92
        $region18: #{tpu_custom_call.1} parent=11 // pred_check_branch
          %140 = sbr.rel (%p138) target = $region20
        $region19: #{tpu_custom_call.1} parent=11 // pred_region
          _
        $region20: #{tpu_custom_call.1} parent=11 // pred_fallthru
          _
      $region12: #{tpu_custom_call.1} parent=5 // pred_fallthru
        _
      %p141 = scmp.lt.s32.totalorder %s12, 2
      // Predicated region
      $region21: #{tpu_custom_call.1} parent=5 // pred_check
        %p142 = pneg %p141
      $region22: #{tpu_custom_call.1} parent=5 // pred_check_branch
        %144 = sbr.rel (%p142) target = $region24
      $region23: #{tpu_custom_call.1} parent=5 // pred_region
        // Predicated region
        $region25: #{tpu_custom_call.1} parent=23 // pred_check
          %p145 = pneg %p44
        $region26: #{tpu_custom_call.1} parent=23 // pred_check_branch
          %147 = sbr.rel (%p145) target = $region28
        $region27: #{tpu_custom_call.1} parent=23 // pred_region
          %p148 = scmp.lt.s32.totalorder %s19, 1
          %s149 = scalar_select %p148, %s19, 1
          %s150 = smul.addr %s149, 4
          %s151 = smul.addr %s150, 8
          %s152 = scalar_lea.vmem %s0, %s151
        $region28: #{tpu_custom_call.1} parent=23 // pred_fallthru
          _
      $region24: #{tpu_custom_call.1} parent=5 // pred_fallthru
        _
      %p153 = scmp.le.s32.totalorder 1, %s12
      %p154 = scmp.lt.s32.totalorder %s12, 3
      %p155 = pnand %p153, %p154
      %p156 = pneg %p155
      // Predicated region
      $region29: #{tpu_custom_call.1} parent=5 // pred_check
        _
      $region30: #{tpu_custom_call.1} parent=5 // pred_check_branch
        %158 = sbr.rel (%p155) target = $region32
      $region31: #{tpu_custom_call.1} parent=5 // pred_region
        %s159 = ssub.s32 %s12, 1
        %p160 = scmp.lt.s32.totalorder %s21, 1
        %s161 = scalar_select %p160, %s21, 1
        %s162 = smul.addr %s161, 4
        %s163 = smul.addr %s162, 8
        %s164 = scalar_lea.vmem %s0, %s163
        %p165 = pneg %p50
        %p166 = pneg %p47
        %p167 = pneg %p71
        %p168 = pneg %p68
        %p169 = pneg %p92
        %p170 = pneg %p89
        %p171 = pneg %p120
        %p172 = pneg %p117
        %s173 = sand.u32 %s107, 1
        %s174 = scalar_lea.sflag [#allocation4], %s173
        %s175 = sand.u32 %s107, 1
        %s176 = smul.addr %s175, 16
        %s177 = scalar_lea.vmem [#allocation3], %s176
        %p178 = scmp.lt.s32.totalorder %s21, 1
        %s179 = scalar_select %p178, %s21, 1
        %s180 = smul.addr %s179, 4
        %s181 = smul.addr %s180, 8
        %s182 = scalar_lea.vmem %s0, %s181
        %s183 = smul.u32 2, %s22
        %s184 = smul.u32 %s22, 16
        %s185 = scalar_lea.vmem %s182, %s184
        %v186 = vld [vmem:[%s185] sm:$0xff]
        %v187 = vld [vmem:[%s185 + $0x8] sm:$0xff]
        %vm188 = vcmask 31744
        %189 = vst.msk [vmem:[#allocation2] sm:$0xff] %vm188, %v186
        %190 = vst.msk [vmem:[#allocation2 + $0x8] sm:$0xff] %vm188, %v187
        %s191 = sadd.s32 %s184, 1
        %s192 = scalar_lea.vmem %s182, %s191
        %v193 = vld [vmem:[%s192] sm:$0xff]
        %v194 = vld [vmem:[%s192 + $0x8] sm:$0xff]
        %197 = vrot.lane.b32.xlu0 %v193, 4
        %v198 = vpop.permute.xlu0 %197
        %199 = vrot.lane.b32.xlu0 %v194, 4
        %v200 = vpop.permute.xlu0 %199
        %vm203 = vcmask 64544
        %204 = vst.msk [vmem:[#allocation2] sm:$0xff] %vm203, %v198
        %205 = vst.msk [vmem:[#allocation2 + $0x8] sm:$0xff] %vm203, %v200
        %s206 = sadd.s32 %s184, 2
        %s207 = scalar_lea.vmem %s182, %s206
        %v208 = vld [vmem:[%s207] sm:$0xff]
        %v209 = vld [vmem:[%s207 + $0x8] sm:$0xff]
        %212 = vrot.lane.b32.xlu0 %v208, 8
        %v213 = vpop.permute.xlu0 %212
        %214 = vrot.lane.b32.xlu0 %v209, 8
        %v215 = vpop.permute.xlu0 %214
        %vm218 = vcmask 97344
        %219 = vst.msk [vmem:[#allocation2] sm:$0xff] %vm218, %v213
        %220 = vst.msk [vmem:[#allocation2 + $0x8] sm:$0xff] %vm218, %v215
        %v221 = vld [vmem:[#allocation2] sm:$0xff]
        %v222 = vld [vmem:[#allocation2 + $0x8] sm:$0xff]
        %v223 = vld [vmem:[%s1] sm:$0xff]
        %v224 = vld [vmem:[%s1 + $0x8] sm:$0xf]
        %v225 = vld [vmem:[%s2] sm:$0x1]
        %v227 = vlaneseq
        %v228 = vshrl.u32 %v227, 7
        %v229 = vsub.s32 0, %v228
        %v230 = vrot.slane %v225, %v229
        %vm232 = vcmask 97280
        %v234 = vsel %vm232, %v221, 0
        %v237 = vsel %vm232, %v222, 0
        %vm239 = vcmask 1043456
        %v241 = vsel %vm239, %v224, 0
        %243 = vmatprep.subr.mxu0 0.0
        %244 = vmatpush1.msra.mxu0 %v223
        %245 = vmatprep.subr.mxu0 0.0
        %246 = vmatpush1.msra.mxu0 %v241
        %247 = vmatprep.subr.mxu0 0.0
        %248 = vmatpush1.msra.mxu0 0.0
        %249 = vmatprep.subr.mxu0 0.0
        %250 = vmatpush1.msra.mxu0 0.0
        %251 = vmatprep.subr.mxu0 0.0
        %252 = vmatpush1.msra.mxu0 0.0
        %253 = vmatprep.subr.mxu0 0.0
        %254 = vmatpush1.msra.mxu0 0.0
        %255 = vmatprep.subr.mxu0 0.0
        %256 = vmatpush1.msra.mxu0 0.0
        %257 = vmatprep.subr.mxu0 0.0
        %258 = vmatpush1.msra.mxu0 0.0
        %259 = vmatprep.subr.mxu0 0.0
        %260 = vmatpush1.msra.mxu0 0.0
        %261 = vmatprep.subr.mxu0 0.0
        %262 = vmatpush1.msra.mxu0 0.0
        %263 = vmatprep.subr.mxu0 0.0
        %264 = vmatpush1.msra.mxu0 0.0
        %265 = vmatprep.subr.mxu0 0.0
        %266 = vmatpush1.msra.mxu0 0.0
        %267 = vmatprep.subr.mxu0 0.0
        %268 = vmatpush1.msra.mxu0 0.0
        %269 = vmatprep.subr.mxu0 0.0
        %270 = vmatpush1.msra.mxu0 0.0
        %271 = vmatprep.subr.mxu0 0.0
        %272 = vmatpush1.msra.mxu0 0.0
        %273 = vmatprep.subr.mxu0 0.0
        %274 = vmatpush1.msra.mxu0 0.0
        %275 = vmatprep.subr.mxu0 0.0
        %276 = vmatpush1.msra.mxu0 0.0
        %277 = vmatprep.subr.mxu0 0.0
        %278 = vmatpush1.msra.mxu0 0.0
        %279 = vmatprep.subr.mxu0 0.0
        %280 = vmatpush1.msra.mxu0 0.0
        %281 = vmatprep.subr.mxu0 0.0
        %282 = vmatpush1.msra.mxu0 0.0
        %283 = vmatprep.subr.mxu0 0.0
        %284 = vmatpush1.msra.mxu0 0.0
        %285 = vmatprep.subr.mxu0 0.0
        %286 = vmatpush1.msra.mxu0 0.0
        %287 = vmatprep.subr.mxu0 0.0
        %288 = vmatpush1.msra.mxu0 0.0
        %289 = vmatprep.subr.mxu0 0.0
        %290 = vmatpush1.msra.mxu0 0.0
        %291 = vmatprep.subr.mxu0 0.0
        %292 = vmatpush1.msra.mxu0 0.0
        %293 = vmatprep.subr.mxu0 0.0
        %294 = vmatpush1.msra.mxu0 0.0
        %295 = vmatprep.subr.mxu0 0.0
        %296 = vmatpush1.msra.mxu0 0.0
        %297 = vmatprep.subr.mxu0 0.0
        %298 = vmatpush1.msra.mxu0 0.0
        %299 = vmatprep.subr.mxu0 0.0
        %300 = vmatpush1.msra.mxu0 0.0
        %301 = vmatprep.subr.mxu0 0.0
        %302 = vmatpush1.msra.mxu0 0.0
        %303 = vmatprep.subr.mxu0 0.0
        %304 = vmatpush1.msra.mxu0 0.0
        %305 = vmatprep.subr.mxu0 0.0
        %306 = vmatpush1.msra.mxu0 0.0
        %307 = vmatprep.mubr.f32.mxu0 0.0
        %308 = vmatmul.mubr.f32.gmra.mrb[0].mxu0 %v234
        %v309 = vpop.f32.mrb[0].mxu0
        %v310 = vadd.f32 %v230, %v309
        %v311 = vpop.f32.mrb[0].mxu0
        %312 = vmatprep.mubr.f32.mxu0 0.0
        %313 = vmatmul.mubr.f32.gmra.mrb[0].mxu0 %v237
        %v314 = vpop.f32.mrb[0].mxu0
        %v315 = vadd.f32 %v230, %v314
        %v316 = vpop.f32.mrb[0].mxu0
        %317 = vdwg.mxu0
        %318 = vst [vmem:[%s177] sm:$0xff] %v310
        %319 = vst [vmem:[%s177 + $0x8] sm:$0xff] %v315
        %s320 = sand.u32 %s107, 1
        %s321 = scalar_lea.sflag [#allocation4], %s320
        %s322 = sand.u32 %s107, 1
        %s323 = smul.addr %s322, 16
        %s324 = scalar_lea.vmem [#allocation3], %s323
        // Predicated region
        $region33: #{tpu_custom_call.1} parent=31 // pred_check
          %p325 = pneg %p117
        $region34: #{tpu_custom_call.1} parent=31 // pred_check_branch
          %327 = sbr.rel (%p325) target = $region36
        $region35: #{tpu_custom_call.1} parent=31 // pred_region
          %s328 = smul.u32 2, %s22
          %s330 = ssub.s32 256, 256
          %331 = vsyncadd %s321, %s330
          %s332 = smul.addr %s21, 2
          %s333 = sadd.s32 %s328, %s332
          %s334 = smul.addr %s333, 128
          %s335 = scalar_lea.hbm %s3, %s334
          %s336 = sshll.u32 %s324, 4
          %s337 = int_to_ptr.vmem [resolvable:$true] %s336
          %342 = dma.vmem_to_hbm [thread:$0]  %s337, 256, %s335, %s321, 128, 128, 8
        $region36: #{tpu_custom_call.1} parent=31 // pred_fallthru
          _
      $region32: #{tpu_custom_call.1} parent=5 // pred_fallthru
        _
      %p343 = scmp.le.s32.totalorder 2, %s12
      // Predicated region
      $region37: #{tpu_custom_call.1} parent=5 // pred_check
        %p344 = pneg %p343
      $region38: #{tpu_custom_call.1} parent=5 // pred_check_branch
        %346 = sbr.rel (%p344) target = $region40
      $region39: #{tpu_custom_call.1} parent=5 // pred_region
        %s347 = ssub.s32 %s12, 2
        // Predicated region
        $region41: #{tpu_custom_call.1} parent=39 // pred_check
          %p348 = pneg %p123
        $region42: #{tpu_custom_call.1} parent=39 // pred_check_branch
          %350 = sbr.rel (%p348) target = $region44
        $region43: #{tpu_custom_call.1} parent=39 // pred_region
          %s351 = sand.u32 %s108, 1
          %s352 = scalar_lea.sflag [#allocation4], %s351
          %s353 = sand.u32 %s108, 1
          %s354 = smul.addr %s353, 16
          %s355 = scalar_lea.vmem [#allocation3], %s354
          %356 = dma.done %s352, 256
        $region44: #{tpu_custom_call.1} parent=39 // pred_fallthru
          _
      $region40: #{tpu_custom_call.1} parent=5 // pred_fallthru
        _
    $region6: #{tpu_custom_call.1} parent=1 // loop_footer
      %s16 = sadd.s32 1, %s12
    $region7: #{tpu_custom_call.1} parent=1 // loop_footer_branch
      %11 = sbr.rel target = $region3
    $region8: #{tpu_custom_call.1} parent=1 // loop_exit
      _
    %357 = vsyncpa [#allocation4], 1
    %s358 = scalar_lea.sflag [#allocation4], 1
    %359 = vsyncpa %s358, 1

</llo_original>
